<compile_context>
chip_gen: v7x
topology: tpu7x:2x2x1
jax: 0.10.0
libtpu: 0.0.40
codegen_flags: <defaults>
</compile_context>

<pallas_src>
import functools

import jax
import jax.numpy as jnp
from jax import lax
from jax.experimental import pallas as pl
from jax.experimental.pallas import tpu as pltpu

_LANE = 128
_SUBLANE = 8


def _round_up(x, m):
    return (x + m - 1) // m * m


# ---------------------------------------------------------------------------
# Kernel 1: embedding lookup + mean over the context window.
# ---------------------------------------------------------------------------
def _embed_mean_kernel(ctx_ref, emb_ref, mean_ref, *, batch, ctx_size):
    """ctx_ref: SMEM (Bp, C) int32; emb_ref: VMEM (Ve, Dp) f32; mean_ref: (Bp, Dp)."""
    # NOTE: out-of-range token indices would read arbitrary table rows (no
    # bounds check on VMEM dynamic slices); inputs are assumed < vocab_size.
    inv_c = 1.0 / ctx_size
    for r in range(batch):                       # tiny static unroll: B*C row reads
        acc = emb_ref[pl.ds(ctx_ref[r, 0], 1), :]
        for c in range(1, ctx_size):
            acc = acc + emb_ref[pl.ds(ctx_ref[r, c], 1), :]
        mean_ref[pl.ds(r, 1), :] = acc * inv_c


# ---------------------------------------------------------------------------
# Kernel 2: Linear layer, streamed over lane-dense vocab tiles.
# ---------------------------------------------------------------------------
def _linear_kernel(mean_ref, w_ref, b_ref, out_ref):
    # w_ref is a (tile_v, Dp) slab of the weight in its native (V, D) layout;
    # contract the shared D axis directly (trans_b) -- no transpose copy needed.
    out_ref[...] = (
        lax.dot_general(
            mean_ref[...], w_ref[...],
            dimension_numbers=(((1,), (1,)), ((), ())),
            preferred_element_type=jnp.float32,
        )
        + b_ref[...]
    )


def cbow_forward(context, emb_table, weight, bias, *, tile_v=None,
                 use_bf16=False):
    """CBOW forward pass.

    context   : (B, C) integer token indices.
    emb_table : (V, D) float32 nn.Embedding weight.
    weight    : (V, D) float32 nn.Linear weight (PyTorch out x in layout).
    bias      : (V,)   float32 nn.Linear bias.
    Returns (B, V) float32 logits.
    """
    B, C = context.shape
    V, D = emb_table.shape

    # Lane/sublane-dense padding.  (Callers should pack >=128/256 rows per call
    # to fill MXU rows; padding here only keeps layouts legal.)
    bp = _round_up(max(B, _SUBLANE), _SUBLANE)
    dp = _round_up(D, _LANE)
    ve = _round_up(V, _SUBLANE)          # embedding-table rows (sublane dim)
    vp_min = _round_up(V, _LANE)         # Linear output columns (lane dim)

    # Whole vocab in one tile when small (grid == 1); otherwise a lane-aligned
    # tile that streams W double-buffered through VMEM.
    if tile_v is None:
        tile_v = vp_min if vp_min <= 2048 else 1024
    tile_v = min(_round_up(tile_v, _LANE), vp_min)
    vp = _round_up(vp_min, tile_v)

    ctx_p = jnp.zeros((bp, C), jnp.int32).at[:B].set(context.astype(jnp.int32))
    emb_p = emb_table
    if (ve, dp) != (V, D):
        emb_p = jnp.zeros((ve, dp), jnp.float32).at[:V, :D].set(emb_table)
    w_p = weight                          # native (V, D) layout: no transpose copy
    if (vp, dp) != (V, D):
        w_p = jnp.zeros((vp, dp), jnp.float32).at[:V, :D].set(weight)
    bias_p = jnp.zeros((1, vp), jnp.float32).at[0, :V].set(bias)

    # ---- Kernel 1: (Bp, Dp) context mean ----------------------------------
    emb_vmem = 2 * ve * dp * 4 + 2 * bp * dp * 4
    mean_p = pl.pallas_call(
        functools.partial(_embed_mean_kernel, batch=bp, ctx_size=C),
        out_shape=jax.ShapeDtypeStruct((bp, dp), jnp.float32),
        grid_spec=pltpu.PrefetchScalarGridSpec(
            num_scalar_prefetch=1,                         # context -> SMEM
            grid=(1,),
            in_specs=[pl.BlockSpec((ve, dp), lambda i, ctx: (0, 0))],
            out_specs=pl.BlockSpec((bp, dp), lambda i, ctx: (0, 0)),
        ),
        compiler_params=pltpu.CompilerParams(
            dimension_semantics=("arbitrary",),
            vmem_limit_bytes=min(max(2 * emb_vmem, 32 * 1024 * 1024),
                                 100 * 1024 * 1024),
        ),
    )(ctx_p, emb_p)

    # ---- Optional bf16 weights/activations stored in HBM ------------------
    # Pre-cast in the wrapper (bytes in HBM are halved); default off so results
    # match the f32 reference numerics.
    if use_bf16:
        mean_p = mean_p.astype(jnp.bfloat16)
        w_p = w_p.astype(jnp.bfloat16)

    # ---- Kernel 2: streamed Linear -----------------------------------------
    itemsize = 2 if use_bf16 else 4
    lin_vmem = (2 * tile_v * dp * itemsize      # W tile, double buffered
                + 2 * bp * tile_v * 4           # output tile
                + 2 * bp * dp * itemsize        # resident mean
                + 2 * tile_v * 4)               # bias tile
    # NOTE: keep this budget under ~48 MiB when targeting v7x (64 MiB VMEM).
    vmem_limit = min(max(2 * lin_vmem, 32 * 1024 * 1024), 100 * 1024 * 1024)

    out_p = pl.pallas_call(
        _linear_kernel,
        out_shape=jax.ShapeDtypeStruct((bp, vp), jnp.float32),
        grid_spec=pltpu.PrefetchScalarGridSpec(
            num_scalar_prefetch=0,
            grid=(vp // tile_v,),
            in_specs=[
                pl.BlockSpec((bp, dp), lambda j: (0, 0)),       # mean (resident)
                pl.BlockSpec((tile_v, dp), lambda j: (j, 0)),   # W tile (streamed)
                pl.BlockSpec((1, tile_v), lambda j: (0, j)),    # bias tile
            ],
            out_specs=pl.BlockSpec((bp, tile_v), lambda j: (0, j)),
        ),
        compiler_params=pltpu.CompilerParams(
            dimension_semantics=("parallel",),   # no carry: shard tiles across TCs
            vmem_limit_bytes=vmem_limit,
        ),
    )(mean_p, w_p, bias_p)

    return out_p[:B, :V]


if __name__ == "__main__":
    # Small deterministic setup (vocab_size stands in for len(target_indices)).
    embedding_dim = 300
    vocab_size = 1000
    batch = 8
    context_size = 4

    key = jax.random.PRNGKey(0)
    k_ctx, k_emb, k_w, k_b = jax.random.split(key, 4)

    context = jax.random.randint(k_ctx, (batch, context_size), 0, vocab_size,
                                 dtype=jnp.int32)
    emb_table = jax.random.normal(k_emb, (vocab_size, embedding_dim),
                                  dtype=jnp.float32) * 0.1
    weight = jax.random.normal(k_w, (vocab_size, embedding_dim),
                               dtype=jnp.float32) * 0.1
    bias = jax.random.normal(k_b, (vocab_size,), dtype=jnp.float32) * 0.1

    out = cbow_forward(context, emb_table, weight, bias)
    out = jax.block_until_ready(out)

    # Pure-JAX reference (highest precision so MXU-pass differences stay small).
    ref_mean = jnp.take(emb_table, context, axis=0).mean(axis=1)
    ref = lax.dot_general(ref_mean, weight, (((1,), (1,)), ((), ())),
                          precision=lax.Precision.HIGHEST) + bias

    assert out.shape == (batch, vocab_size)
    assert jnp.allclose(out, ref, atol=1e-3, rtol=1e-3), "mismatch vs JAX reference"

    print("KERNEL_OK")
</pallas_src>

<mosaic_0001>
module attributes {stable_mosaic.version = 11 : i64} {
  func.func @_embed_mean_kernel(%arg0: i32, %arg1: memref<8x4xi32, #tpu.memory_space<smem>>, %arg2: memref<1000x384xf32, #tpu.memory_space<vmem>>, %arg3: memref<8x384xf32, #tpu.memory_space<vmem>>) attributes {dimension_semantics = [#tpu.dimension_semantics<arbitrary>], iteration_bounds = array<i64: 1>, scalar_prefetch = 1 : i64, scratch_operands = 0 : i64, tpu.core_type = #tpu.core_type<tc>, window_params = [{pipeline_mode = #tpu.pipeline_mode<synchronous>, transform_indices = @transform_0, window_bounds = array<i64: 1000, 384>}, {pipeline_mode = #tpu.pipeline_mode<synchronous>, transform_indices = @transform_1, window_bounds = array<i64: 8, 384>}]} {
    %c0 = arith.constant 0 : index
    %c0_0 = arith.constant 0 : index
    %0 = memref.load %arg1[%c0, %c0_0] : memref<8x4xi32, #tpu.memory_space<smem>>
    %1 = arith.index_cast %0 : i32 to index
    %c0_1 = arith.constant 0 : index
    %2 = vector.load %arg2[%1, %c0_1] : memref<1000x384xf32, #tpu.memory_space<vmem>>, vector<1x384xf32>
    %c0_2 = arith.constant 0 : index
    %c1 = arith.constant 1 : index
    %3 = memref.load %arg1[%c0_2, %c1] : memref<8x4xi32, #tpu.memory_space<smem>>
    %4 = arith.index_cast %3 : i32 to index
    %c0_3 = arith.constant 0 : index
    %5 = vector.load %arg2[%4, %c0_3] : memref<1000x384xf32, #tpu.memory_space<vmem>>, vector<1x384xf32>
    %6 = arith.addf %2, %5 : vector<1x384xf32>
    %c0_4 = arith.constant 0 : index
    %c2 = arith.constant 2 : index
    %7 = memref.load %arg1[%c0_4, %c2] : memref<8x4xi32, #tpu.memory_space<smem>>
    %8 = arith.index_cast %7 : i32 to index
    %c0_5 = arith.constant 0 : index
    %9 = vector.load %arg2[%8, %c0_5] : memref<1000x384xf32, #tpu.memory_space<vmem>>, vector<1x384xf32>
    %10 = arith.addf %6, %9 : vector<1x384xf32>
    %c0_6 = arith.constant 0 : index
    %c3 = arith.constant 3 : index
    %11 = memref.load %arg1[%c0_6, %c3] : memref<8x4xi32, #tpu.memory_space<smem>>
    %12 = arith.index_cast %11 : i32 to index
    %c0_7 = arith.constant 0 : index
    %13 = vector.load %arg2[%12, %c0_7] : memref<1000x384xf32, #tpu.memory_space<vmem>>, vector<1x384xf32>
    %14 = arith.addf %10, %13 : vector<1x384xf32>
    %cst = arith.constant 2.500000e-01 : f32
    %15 = vector.broadcast %cst : f32 to vector<1x384xf32>
    %16 = arith.mulf %14, %15 : vector<1x384xf32>
    %c0_8 = arith.constant 0 : index
    %c0_9 = arith.constant 0 : index
    %17 = vector.load %arg3[%c0_8, %c0_9] : memref<8x384xf32, #tpu.memory_space<vmem>>, vector<1x384xf32>
    tpu.vector_store %arg3[%c0_8, %c0_9], %16 {strides = array<i32>} : memref<8x384xf32, #tpu.memory_space<vmem>>, vector<1x384xf32>,
    %c1_10 = arith.constant 1 : index
    %c0_11 = arith.constant 0 : index
    %18 = memref.load %arg1[%c1_10, %c0_11] : memref<8x4xi32, #tpu.memory_space<smem>>
    %19 = arith.index_cast %18 : i32 to index
    %c0_12 = arith.constant 0 : index
    %20 = vector.load %arg2[%19, %c0_12] : memref<1000x384xf32, #tpu.memory_space<vmem>>, vector<1x384xf32>
    %c1_13 = arith.constant 1 : index
    %c1_14 = arith.constant 1 : index
    %21 = memref.load %arg1[%c1_13, %c1_14] : memref<8x4xi32, #tpu.memory_space<smem>>
    %22 = arith.index_cast %21 : i32 to index
    %c0_15 = arith.constant 0 : index
    %23 = vector.load %arg2[%22, %c0_15] : memref<1000x384xf32, #tpu.memory_space<vmem>>, vector<1x384xf32>
    %24 = arith.addf %20, %23 : vector<1x384xf32>
    %c1_16 = arith.constant 1 : index
    %c2_17 = arith.constant 2 : index
    %25 = memref.load %arg1[%c1_16, %c2_17] : memref<8x4xi32, #tpu.memory_space<smem>>
    %26 = arith.index_cast %25 : i32 to index
    %c0_18 = arith.constant 0 : index
    %27 = vector.load %arg2[%26, %c0_18] : memref<1000x384xf32, #tpu.memory_space<vmem>>, vector<1x384xf32>
    %28 = arith.addf %24, %27 : vector<1x384xf32>
    %c1_19 = arith.constant 1 : index
    %c3_20 = arith.constant 3 : index
    %29 = memref.load %arg1[%c1_19, %c3_20] : memref<8x4xi32, #tpu.memory_space<smem>>
    %30 = arith.index_cast %29 : i32 to index
    %c0_21 = arith.constant 0 : index
    %31 = vector.load %arg2[%30, %c0_21] : memref<1000x384xf32, #tpu.memory_space<vmem>>, vector<1x384xf32>
    %32 = arith.addf %28, %31 : vector<1x384xf32>
    %cst_22 = arith.constant 2.500000e-01 : f32
    %33 = vector.broadcast %cst_22 : f32 to vector<1x384xf32>
    %34 = arith.mulf %32, %33 : vector<1x384xf32>
    %c1_23 = arith.constant 1 : index
    %c0_24 = arith.constant 0 : index
    %35 = vector.load %arg3[%c1_23, %c0_24] : memref<8x384xf32, #tpu.memory_space<vmem>>, vector<1x384xf32>
    tpu.vector_store %arg3[%c1_23, %c0_24], %34 {strides = array<i32>} : memref<8x384xf32, #tpu.memory_space<vmem>>, vector<1x384xf32>,
    %c2_25 = arith.constant 2 : index
    %c0_26 = arith.constant 0 : index
    %36 = memref.load %arg1[%c2_25, %c0_26] : memref<8x4xi32, #tpu.memory_space<smem>>
    %37 = arith.index_cast %36 : i32 to index
    %c0_27 = arith.constant 0 : index
    %38 = vector.load %arg2[%37, %c0_27] : memref<1000x384xf32, #tpu.memory_space<vmem>>, vector<1x384xf32>
    %c2_28 = arith.constant 2 : index
    %c1_29 = arith.constant 1 : index
    %39 = memref.load %arg1[%c2_28, %c1_29] : memref<8x4xi32, #tpu.memory_space<smem>>
    %40 = arith.index_cast %39 : i32 to index
    %c0_30 = arith.constant 0 : index
    %41 = vector.load %arg2[%40, %c0_30] : memref<1000x384xf32, #tpu.memory_space<vmem>>, vector<1x384xf32>
    %42 = arith.addf %38, %41 : vector<1x384xf32>
    %c2_31 = arith.constant 2 : index
    %c2_32 = arith.constant 2 : index
    %43 = memref.load %arg1[%c2_31, %c2_32] : memref<8x4xi32, #tpu.memory_space<smem>>
    %44 = arith.index_cast %43 : i32 to index
    %c0_33 = arith.constant 0 : index
    %45 = vector.load %arg2[%44, %c0_33] : memref<1000x384xf32, #tpu.memory_space<vmem>>, vector<1x384xf32>
    %46 = arith.addf %42, %45 : vector<1x384xf32>
    %c2_34 = arith.constant 2 : index
    %c3_35 = arith.constant 3 : index
    %47 = memref.load %arg1[%c2_34, %c3_35] : memref<8x4xi32, #tpu.memory_space<smem>>
    %48 = arith.index_cast %47 : i32 to index
    %c0_36 = arith.constant 0 : index
    %49 = vector.load %arg2[%48, %c0_36] : memref<1000x384xf32, #tpu.memory_space<vmem>>, vector<1x384xf32>
    %50 = arith.addf %46, %49 : vector<1x384xf32>
    %cst_37 = arith.constant 2.500000e-01 : f32
    %51 = vector.broadcast %cst_37 : f32 to vector<1x384xf32>
    %52 = arith.mulf %50, %51 : vector<1x384xf32>
    %c2_38 = arith.constant 2 : index
    %c0_39 = arith.constant 0 : index
    %53 = vector.load %arg3[%c2_38, %c0_39] : memref<8x384xf32, #tpu.memory_space<vmem>>, vector<1x384xf32>
    tpu.vector_store %arg3[%c2_38, %c0_39], %52 {strides = array<i32>} : memref<8x384xf32, #tpu.memory_space<vmem>>, vector<1x384xf32>,
    %c3_40 = arith.constant 3 : index
    %c0_41 = arith.constant 0 : index
    %54 = memref.load %arg1[%c3_40, %c0_41] : memref<8x4xi32, #tpu.memory_space<smem>>
    %55 = arith.index_cast %54 : i32 to index
    %c0_42 = arith.constant 0 : index
    %56 = vector.load %arg2[%55, %c0_42] : memref<1000x384xf32, #tpu.memory_space<vmem>>, vector<1x384xf32>
    %c3_43 = arith.constant 3 : index
    %c1_44 = arith.constant 1 : index
    %57 = memref.load %arg1[%c3_43, %c1_44] : memref<8x4xi32, #tpu.memory_space<smem>>
    %58 = arith.index_cast %57 : i32 to index
    %c0_45 = arith.constant 0 : index
    %59 = vector.load %arg2[%58, %c0_45] : memref<1000x384xf32, #tpu.memory_space<vmem>>, vector<1x384xf32>
    %60 = arith.addf %56, %59 : vector<1x384xf32>
    %c3_46 = arith.constant 3 : index
    %c2_47 = arith.constant 2 : index
    %61 = memref.load %arg1[%c3_46, %c2_47] : memref<8x4xi32, #tpu.memory_space<smem>>
    %62 = arith.index_cast %61 : i32 to index
    %c0_48 = arith.constant 0 : index
    %63 = vector.load %arg2[%62, %c0_48] : memref<1000x384xf32, #tpu.memory_space<vmem>>, vector<1x384xf32>
    %64 = arith.addf %60, %63 : vector<1x384xf32>
    %c3_49 = arith.constant 3 : index
    %c3_50 = arith.constant 3 : index
    %65 = memref.load %arg1[%c3_49, %c3_50] : memref<8x4xi32, #tpu.memory_space<smem>>
    %66 = arith.index_cast %65 : i32 to index
    %c0_51 = arith.constant 0 : index
    %67 = vector.load %arg2[%66, %c0_51] : memref<1000x384xf32, #tpu.memory_space<vmem>>, vector<1x384xf32>
    %68 = arith.addf %64, %67 : vector<1x384xf32>
    %cst_52 = arith.constant 2.500000e-01 : f32
    %69 = vector.broadcast %cst_52 : f32 to vector<1x384xf32>
    %70 = arith.mulf %68, %69 : vector<1x384xf32>
    %c3_53 = arith.constant 3 : index
    %c0_54 = arith.constant 0 : index
    %71 = vector.load %arg3[%c3_53, %c0_54] : memref<8x384xf32, #tpu.memory_space<vmem>>, vector<1x384xf32>
    tpu.vector_store %arg3[%c3_53, %c0_54], %70 {strides = array<i32>} : memref<8x384xf32, #tpu.memory_space<vmem>>, vector<1x384xf32>,
    %c4 = arith.constant 4 : index
    %c0_55 = arith.constant 0 : index
    %72 = memref.load %arg1[%c4, %c0_55] : memref<8x4xi32, #tpu.memory_space<smem>>
    %73 = arith.index_cast %72 : i32 to index
    %c0_56 = arith.constant 0 : index
    %74 = vector.load %arg2[%73, %c0_56] : memref<1000x384xf32, #tpu.memory_space<vmem>>, vector<1x384xf32>
    %c4_57 = arith.constant 4 : index
    %c1_58 = arith.constant 1 : index
    %75 = memref.load %arg1[%c4_57, %c1_58] : memref<8x4xi32, #tpu.memory_space<smem>>
    %76 = arith.index_cast %75 : i32 to index
    %c0_59 = arith.constant 0 : index
    %77 = vector.load %arg2[%76, %c0_59] : memref<1000x384xf32, #tpu.memory_space<vmem>>, vector<1x384xf32>
    %78 = arith.addf %74, %77 : vector<1x384xf32>
    %c4_60 = arith.constant 4 : index
    %c2_61 = arith.constant 2 : index
    %79 = memref.load %arg1[%c4_60, %c2_61] : memref<8x4xi32, #tpu.memory_space<smem>>
    %80 = arith.index_cast %79 : i32 to index
    %c0_62 = arith.constant 0 : index
    %81 = vector.load %arg2[%80, %c0_62] : memref<1000x384xf32, #tpu.memory_space<vmem>>, vector<1x384xf32>
    %82 = arith.addf %78, %81 : vector<1x384xf32>
    %c4_63 = arith.constant 4 : index
    %c3_64 = arith.constant 3 : index
    %83 = memref.load %arg1[%c4_63, %c3_64] : memref<8x4xi32, #tpu.memory_space<smem>>
    %84 = arith.index_cast %83 : i32 to index
    %c0_65 = arith.constant 0 : index
    %85 = vector.load %arg2[%84, %c0_65] : memref<1000x384xf32, #tpu.memory_space<vmem>>, vector<1x384xf32>
    %86 = arith.addf %82, %85 : vector<1x384xf32>
    %cst_66 = arith.constant 2.500000e-01 : f32
    %87 = vector.broadcast %cst_66 : f32 to vector<1x384xf32>
    %88 = arith.mulf %86, %87 : vector<1x384xf32>
    %c4_67 = arith.constant 4 : index
    %c0_68 = arith.constant 0 : index
    %89 = vector.load %arg3[%c4_67, %c0_68] : memref<8x384xf32, #tpu.memory_space<vmem>>, vector<1x384xf32>
    tpu.vector_store %arg3[%c4_67, %c0_68], %88 {strides = array<i32>} : memref<8x384xf32, #tpu.memory_space<vmem>>, vector<1x384xf32>,
    %c5 = arith.constant 5 : index
    %c0_69 = arith.constant 0 : index
    %90 = memref.load %arg1[%c5, %c0_69] : memref<8x4xi32, #tpu.memory_space<smem>>
    %91 = arith.index_cast %90 : i32 to index
    %c0_70 = arith.constant 0 : index
    %92 = vector.load %arg2[%91, %c0_70] : memref<1000x384xf32, #tpu.memory_space<vmem>>, vector<1x384xf32>
    %c5_71 = arith.constant 5 : index
    %c1_72 = arith.constant 1 : index
    %93 = memref.load %arg1[%c5_71, %c1_72] : memref<8x4xi32, #tpu.memory_space<smem>>
    %94 = arith.index_cast %93 : i32 to index
    %c0_73 = arith.constant 0 : index
    %95 = vector.load %arg2[%94, %c0_73] : memref<1000x384xf32, #tpu.memory_space<vmem>>, vector<1x384xf32>
    %96 = arith.addf %92, %95 : vector<1x384xf32>
    %c5_74 = arith.constant 5 : index
    %c2_75 = arith.constant 2 : index
    %97 = memref.load %arg1[%c5_74, %c2_75] : memref<8x4xi32, #tpu.memory_space<smem>>
    %98 = arith.index_cast %97 : i32 to index
    %c0_76 = arith.constant 0 : index
    %99 = vector.load %arg2[%98, %c0_76] : memref<1000x384xf32, #tpu.memory_space<vmem>>, vector<1x384xf32>
    %100 = arith.addf %96, %99 : vector<1x384xf32>
    %c5_77 = arith.constant 5 : index
    %c3_78 = arith.constant 3 : index
    %101 = memref.load %arg1[%c5_77, %c3_78] : memref<8x4xi32, #tpu.memory_space<smem>>
    %102 = arith.index_cast %101 : i32 to index
    %c0_79 = arith.constant 0 : index
    %103 = vector.load %arg2[%102, %c0_79] : memref<1000x384xf32, #tpu.memory_space<vmem>>, vector<1x384xf32>
    %104 = arith.addf %100, %103 : vector<1x384xf32>
    %cst_80 = arith.constant 2.500000e-01 : f32
    %105 = vector.broadcast %cst_80 : f32 to vector<1x384xf32>
    %106 = arith.mulf %104, %105 : vector<1x384xf32>
    %c5_81 = arith.constant 5 : index
    %c0_82 = arith.constant 0 : index
    %107 = vector.load %arg3[%c5_81, %c0_82] : memref<8x384xf32, #tpu.memory_space<vmem>>, vector<1x384xf32>
    tpu.vector_store %arg3[%c5_81, %c0_82], %106 {strides = array<i32>} : memref<8x384xf32, #tpu.memory_space<vmem>>, vector<1x384xf32>,
    %c6 = arith.constant 6 : index
    %c0_83 = arith.constant 0 : index
    %108 = memref.load %arg1[%c6, %c0_83] : memref<8x4xi32, #tpu.memory_space<smem>>
    %109 = arith.index_cast %108 : i32 to index
    %c0_84 = arith.constant 0 : index
    %110 = vector.load %arg2[%109, %c0_84] : memref<1000x384xf32, #tpu.memory_space<vmem>>, vector<1x384xf32>
    %c6_85 = arith.constant 6 : index
    %c1_86 = arith.constant 1 : index
    %111 = memref.load %arg1[%c6_85, %c1_86] : memref<8x4xi32, #tpu.memory_space<smem>>
    %112 = arith.index_cast %111 : i32 to index
    %c0_87 = arith.constant 0 : index
    %113 = vector.load %arg2[%112, %c0_87] : memref<1000x384xf32, #tpu.memory_space<vmem>>, vector<1x384xf32>
    %114 = arith.addf %110, %113 : vector<1x384xf32>
    %c6_88 = arith.constant 6 : index
    %c2_89 = arith.constant 2 : index
    %115 = memref.load %arg1[%c6_88, %c2_89] : memref<8x4xi32, #tpu.memory_space<smem>>
    %116 = arith.index_cast %115 : i32 to index
    %c0_90 = arith.constant 0 : index
    %117 = vector.load %arg2[%116, %c0_90] : memref<1000x384xf32, #tpu.memory_space<vmem>>, vector<1x384xf32>
    %118 = arith.addf %114, %117 : vector<1x384xf32>
    %c6_91 = arith.constant 6 : index
    %c3_92 = arith.constant 3 : index
    %119 = memref.load %arg1[%c6_91, %c3_92] : memref<8x4xi32, #tpu.memory_space<smem>>
    %120 = arith.index_cast %119 : i32 to index
    %c0_93 = arith.constant 0 : index
    %121 = vector.load %arg2[%120, %c0_93] : memref<1000x384xf32, #tpu.memory_space<vmem>>, vector<1x384xf32>
    %122 = arith.addf %118, %121 : vector<1x384xf32>
    %cst_94 = arith.constant 2.500000e-01 : f32
    %123 = vector.broadcast %cst_94 : f32 to vector<1x384xf32>
    %124 = arith.mulf %122, %123 : vector<1x384xf32>
    %c6_95 = arith.constant 6 : index
    %c0_96 = arith.constant 0 : index
    %125 = vector.load %arg3[%c6_95, %c0_96] : memref<8x384xf32, #tpu.memory_space<vmem>>, vector<1x384xf32>
    tpu.vector_store %arg3[%c6_95, %c0_96], %124 {strides = array<i32>} : memref<8x384xf32, #tpu.memory_space<vmem>>, vector<1x384xf32>,
    %c7 = arith.constant 7 : index
    %c0_97 = arith.constant 0 : index
    %126 = memref.load %arg1[%c7, %c0_97] : memref<8x4xi32, #tpu.memory_space<smem>>
    %127 = arith.index_cast %126 : i32 to index
    %c0_98 = arith.constant 0 : index
    %128 = vector.load %arg2[%127, %c0_98] : memref<1000x384xf32, #tpu.memory_space<vmem>>, vector<1x384xf32>
    %c7_99 = arith.constant 7 : index
    %c1_100 = arith.constant 1 : index
    %129 = memref.load %arg1[%c7_99, %c1_100] : memref<8x4xi32, #tpu.memory_space<smem>>
    %130 = arith.index_cast %129 : i32 to index
    %c0_101 = arith.constant 0 : index
    %131 = vector.load %arg2[%130, %c0_101] : memref<1000x384xf32, #tpu.memory_space<vmem>>, vector<1x384xf32>
    %132 = arith.addf %128, %131 : vector<1x384xf32>
    %c7_102 = arith.constant 7 : index
    %c2_103 = arith.constant 2 : index
    %133 = memref.load %arg1[%c7_102, %c2_103] : memref<8x4xi32, #tpu.memory_space<smem>>
    %134 = arith.index_cast %133 : i32 to index
    %c0_104 = arith.constant 0 : index
    %135 = vector.load %arg2[%134, %c0_104] : memref<1000x384xf32, #tpu.memory_space<vmem>>, vector<1x384xf32>
    %136 = arith.addf %132, %135 : vector<1x384xf32>
    %c7_105 = arith.constant 7 : index
    %c3_106 = arith.constant 3 : index
    %137 = memref.load %arg1[%c7_105, %c3_106] : memref<8x4xi32, #tpu.memory_space<smem>>
    %138 = arith.index_cast %137 : i32 to index
    %c0_107 = arith.constant 0 : index
    %139 = vector.load %arg2[%138, %c0_107] : memref<1000x384xf32, #tpu.memory_space<vmem>>, vector<1x384xf32>
    %140 = arith.addf %136, %139 : vector<1x384xf32>
    %cst_108 = arith.constant 2.500000e-01 : f32
    %141 = vector.broadcast %cst_108 : f32 to vector<1x384xf32>
    %142 = arith.mulf %140, %141 : vector<1x384xf32>
    %c7_109 = arith.constant 7 : index
    %c0_110 = arith.constant 0 : index
    %143 = vector.load %arg3[%c7_109, %c0_110] : memref<8x384xf32, #tpu.memory_space<vmem>>, vector<1x384xf32>
    tpu.vector_store %arg3[%c7_109, %c0_110], %142 {strides = array<i32>} : memref<8x384xf32, #tpu.memory_space<vmem>>, vector<1x384xf32>,
    return
  }
  func.func @transform_0(%arg0: i32, %arg1: memref<8x4xi32, #tpu.memory_space<smem>>) -> (i32, i32) {
    %c0_i32 = arith.constant 0 : i32
    %c0_i32_0 = arith.constant 0 : i32
    %c0_i32_1 = arith.constant 0 : i32
    return %c0_i32, %c0_i32_0 : i32, i32
  }
  func.func @transform_1(%arg0: i32, %arg1: memref<8x4xi32, #tpu.memory_space<smem>>) -> (i32, i32) {
    %c0_i32 = arith.constant 0 : i32
    %c0_i32_0 = arith.constant 0 : i32
    %c0_i32_1 = arith.constant 0 : i32
    return %c0_i32, %c0_i32_0 : i32, i32
  }
}

</mosaic_0001>

<llo_original>
// kernel: tpu_custom_call.1
$region0: #{tpu_custom_call.1}
  #allocation0 [shape = 'u32[]', space=smem, size = 0x4, offset = 0x4, fixed_abs, tag = 'smem constant byte address 0x4 - core index']
  #allocation1 [shape = 'u32[144,128]{1,0:T(1,128)}', space=vmem, size = 0x12000, scoped, tag = 'internal scratch']
  #allocation2 [shape = 's32[1]{0}', space=sflag, size = 0x4, scoped, tag = 'scoped memory for tpu_custom_call.1']
  #allocation3 [shape = 'u8[4096]{0}', space=smem, size = 0x1000, scoped, tag = 'prefetched SMEM operand 0']
  %s0 = inlined_call_operand.vmem [shape: s32[8,4], index: 0, kind: input, shape index: {}]
  %s1 = inlined_call_operand.hbm [shape: f32[1000,384], index: 1, kind: input, shape index: {}]
  %s2 = inlined_call_operand.hbm [shape: f32[8,384], index: 2, kind: output, shape index: {}]
  %s3 = sld [smem:[#allocation0]]
  $region18: #{tpu_custom_call.1} parent=0
    _
  %s5 = ssub.s32 1, %s3
  %s6 = scalar_select 0, %s5, %s3
  %s7 = sshll.u32 %s0, 4
  %s8 = int_to_ptr.vmem [resolvable:$true] %s7
  %10 = dma.vmem_to_smem %s8, 128, [#allocation3], [#allocation2]
  %11 = dma.done [#allocation2], 128
  %12 = sfence
  $region1: #{tpu_custom_call.1} parent=0
    #allocation4 [shape = 'u8[1536000]{0}', space=vmem, size = 0x177000, scoped, tag = 'input window, operand 1, single buffered']
    #allocation5 [shape = 's32[1]{0}', space=sflag, size = 0x4, scoped, tag = 'scoped memory for tpu_custom_call.1']
    #allocation6 [shape = 's32[1]{0}', space=sflag, size = 0x4, scoped, tag = 'scoped memory for tpu_custom_call.1']
    #allocation7 [shape = 'u8[12288]{0}', space=vmem, size = 0x3000, scoped, tag = 'output window, operand 0, single buffered']
    %13 = vsyncpa [#allocation5], 0
    %14 = vsyncpa [#allocation6], 0
    // Predicated region
    $region2: #{tpu_custom_call.1} parent=1 // pred_check
      _
    $region3: #{tpu_custom_call.1} parent=1 // pred_check_branch
      %16 = sbr.rel (0) target = $region5
    $region4: #{tpu_custom_call.1} parent=1 // pred_region
      %s18 = ssub.s32 48000, 48000
      %19 = vsyncadd [#allocation5], %s18
      %s20 = sshll.u32 [#allocation4], 4
      %s21 = int_to_ptr.vmem [resolvable:$true] %s20
      %26 = dma.hbm_to_vmem [thread:$0]  %s1, 48000, %s21, [#allocation5], 384, 384, 24
    $region5: #{tpu_custom_call.1} parent=1 // pred_fallthru
      _
    // Predicated region
    $region6: #{tpu_custom_call.1} parent=1 // pred_check
      _
    $region7: #{tpu_custom_call.1} parent=1 // pred_check_branch
      %28 = sbr.rel (0) target = $region9
    $region8: #{tpu_custom_call.1} parent=1 // pred_region
      %29 = dma.done [#allocation5], 48000
    $region9: #{tpu_custom_call.1} parent=1 // pred_fallthru
      _
    %s30 = sld [smem:[#allocation3]]
    %s31 = sshra.s32 %s30, 3
    %s32 = sand.u32 %s30, 7
    %s33 = sshra.s32 %s30, 3
    %s34 = sand.u32 %s30, 7
    %s35 = smul.u32 %s31, 3
    %s36 = smul.u32 %s35, 8
    %s37 = sadd.s32 %s36, %s34
    %s38 = scalar_lea.vmem [#allocation4], %s37
    %v39 = vld [vmem:[%s38] ss:$8 sm:$0x7]
    %s40 = sld [smem:[#allocation3 + $0x1]]
    %s41 = sshra.s32 %s40, 3
    %s42 = sand.u32 %s40, 7
    %s43 = sshra.s32 %s40, 3
    %s44 = sand.u32 %s40, 7
    %s45 = smul.u32 %s41, 3
    %s46 = smul.u32 %s45, 8
    %s47 = sadd.s32 %s46, %s44
    %s48 = scalar_lea.vmem [#allocation4], %s47
    %v49 = vld [vmem:[%s48] ss:$8 sm:$0x7]
    %v50 = vadd.f32 %v39, %v49
    %s51 = sld [smem:[#allocation3 + $0x2]]
    %s52 = sshra.s32 %s51, 3
    %s53 = sand.u32 %s51, 7
    %s54 = sshra.s32 %s51, 3
    %s55 = sand.u32 %s51, 7
    %s56 = smul.u32 %s52, 3
    %s57 = smul.u32 %s56, 8
    %s58 = sadd.s32 %s57, %s55
    %s59 = scalar_lea.vmem [#allocation4], %s58
    %v60 = vld [vmem:[%s59] ss:$8 sm:$0x7]
    %v61 = vadd.f32 %v50, %v60
    %s62 = sld [smem:[#allocation3 + $0x3]]
    %s63 = sshra.s32 %s62, 3
    %s64 = sand.u32 %s62, 7
    %s65 = sshra.s32 %s62, 3
    %s66 = sand.u32 %s62, 7
    %s67 = smul.u32 %s63, 3
    %s68 = smul.u32 %s67, 8
    %s69 = sadd.s32 %s68, %s66
    %s70 = scalar_lea.vmem [#allocation4], %s69
    %v71 = vld [vmem:[%s70] ss:$8 sm:$0x7]
    %v72 = vadd.f32 %v61, %v71
    %v73 = vmul.f32 %v72, 0.25
    %v74 = vlaneseq
    %vm75 = vcmp.ge.s32.totalorder %v74, 0
    %vm76 = vcmp.lt.s32.totalorder %v74, 384
    %vm77 = vmand %vm75, %vm76
    %78 = vst.msk [vmem:[#allocation7] ss:$8 sm:$0x7] %vm77, %v73
    %79 = vst.msk [vmem:[#allocation7] ss:$8 sm:$0x0] %vm77, %v73
    %s80 = sld [smem:[#allocation3 + $0x80]]
    %s81 = sshra.s32 %s80, 3
    %s82 = sand.u32 %s80, 7
    %s83 = sshra.s32 %s80, 3
    %s84 = sand.u32 %s80, 7
    %s85 = smul.u32 %s81, 3
    %s86 = smul.u32 %s85, 8
    %s87 = sadd.s32 %s86, %s84
    %s88 = scalar_lea.vmem [#allocation4], %s87
    %v89 = vld [vmem:[%s88] ss:$8 sm:$0x7]
    %s90 = sld [smem:[#allocation3 + $0x81]]
    %s91 = sshra.s32 %s90, 3
    %s92 = sand.u32 %s90, 7
    %s93 = sshra.s32 %s90, 3
    %s94 = sand.u32 %s90, 7
    %s95 = smul.u32 %s91, 3
    %s96 = smul.u32 %s95, 8
    %s97 = sadd.s32 %s96, %s94
    %s98 = scalar_lea.vmem [#allocation4], %s97
    %v99 = vld [vmem:[%s98] ss:$8 sm:$0x7]
    %v100 = vadd.f32 %v89, %v99
    %s101 = sld [smem:[#allocation3 + $0x82]]
    %s102 = sshra.s32 %s101, 3
    %s103 = sand.u32 %s101, 7
    %s104 = sshra.s32 %s101, 3
    %s105 = sand.u32 %s101, 7
    %s106 = smul.u32 %s102, 3
    %s107 = smul.u32 %s106, 8
    %s108 = sadd.s32 %s107, %s105
    %s109 = scalar_lea.vmem [#allocation4], %s108
    %v110 = vld [vmem:[%s109] ss:$8 sm:$0x7]
    %v111 = vadd.f32 %v100, %v110
    %s112 = sld [smem:[#allocation3 + $0x83]]
    %s113 = sshra.s32 %s112, 3
    %s114 = sand.u32 %s112, 7
    %s115 = sshra.s32 %s112, 3
    %s116 = sand.u32 %s112, 7
    %s117 = smul.u32 %s113, 3
    %s118 = smul.u32 %s117, 8
    %s119 = sadd.s32 %s118, %s116
    %s120 = scalar_lea.vmem [#allocation4], %s119
    %v121 = vld [vmem:[%s120] ss:$8 sm:$0x7]
    %v122 = vadd.f32 %v111, %v121
    %v123 = vmul.f32 %v122, 0.25
    %s124 = scalar_lea.vmem [#allocation7], 1
    %125 = vst.msk [vmem:[%s124] ss:$8 sm:$0x7] %vm77, %v123
    %126 = vst.msk [vmem:[%s124] ss:$8 sm:$0x0] %vm77, %v123
    %s127 = sld [smem:[#allocation3 + $0x100]]
    %s128 = sshra.s32 %s127, 3
    %s129 = sand.u32 %s127, 7
    %s130 = sshra.s32 %s127, 3
    %s131 = sand.u32 %s127, 7
    %s132 = smul.u32 %s128, 3
    %s133 = smul.u32 %s132, 8
    %s134 = sadd.s32 %s133, %s131
    %s135 = scalar_lea.vmem [#allocation4], %s134
    %v136 = vld [vmem:[%s135] ss:$8 sm:$0x7]
    %s137 = sld [smem:[#allocation3 + $0x101]]
    %s138 = sshra.s32 %s137, 3
    %s139 = sand.u32 %s137, 7
    %s140 = sshra.s32 %s137, 3
    %s141 = sand.u32 %s137, 7
    %s142 = smul.u32 %s138, 3
    %s143 = smul.u32 %s142, 8
    %s144 = sadd.s32 %s143, %s141
    %s145 = scalar_lea.vmem [#allocation4], %s144
    %v146 = vld [vmem:[%s145] ss:$8 sm:$0x7]
    %v147 = vadd.f32 %v136, %v146
    %s148 = sld [smem:[#allocation3 + $0x102]]
    %s149 = sshra.s32 %s148, 3
    %s150 = sand.u32 %s148, 7
    %s151 = sshra.s32 %s148, 3
    %s152 = sand.u32 %s148, 7
    %s153 = smul.u32 %s149, 3
    %s154 = smul.u32 %s153, 8
    %s155 = sadd.s32 %s154, %s152
    %s156 = scalar_lea.vmem [#allocation4], %s155
    %v157 = vld [vmem:[%s156] ss:$8 sm:$0x7]
    %v158 = vadd.f32 %v147, %v157
    %s159 = sld [smem:[#allocation3 + $0x103]]
    %s160 = sshra.s32 %s159, 3
    %s161 = sand.u32 %s159, 7
    %s162 = sshra.s32 %s159, 3
    %s163 = sand.u32 %s159, 7
    %s164 = smul.u32 %s160, 3
    %s165 = smul.u32 %s164, 8
    %s166 = sadd.s32 %s165, %s163
    %s167 = scalar_lea.vmem [#allocation4], %s166
    %v168 = vld [vmem:[%s167] ss:$8 sm:$0x7]
    %v169 = vadd.f32 %v158, %v168
    %v170 = vmul.f32 %v169, 0.25
    %s171 = scalar_lea.vmem [#allocation7], 2
    %172 = vst.msk [vmem:[%s171] ss:$8 sm:$0x7] %vm77, %v170
    %173 = vst.msk [vmem:[%s171] ss:$8 sm:$0x0] %vm77, %v170
    %s174 = sld [smem:[#allocation3 + $0x180]]
    %s175 = sshra.s32 %s174, 3
    %s176 = sand.u32 %s174, 7
    %s177 = sshra.s32 %s174, 3
    %s178 = sand.u32 %s174, 7
    %s179 = smul.u32 %s175, 3
    %s180 = smul.u32 %s179, 8
    %s181 = sadd.s32 %s180, %s178
    %s182 = scalar_lea.vmem [#allocation4], %s181
    %v183 = vld [vmem:[%s182] ss:$8 sm:$0x7]
    %s184 = sld [smem:[#allocation3 + $0x181]]
    %s185 = sshra.s32 %s184, 3
    %s186 = sand.u32 %s184, 7
    %s187 = sshra.s32 %s184, 3
    %s188 = sand.u32 %s184, 7
    %s189 = smul.u32 %s185, 3
    %s190 = smul.u32 %s189, 8
    %s191 = sadd.s32 %s190, %s188
    %s192 = scalar_lea.vmem [#allocation4], %s191
    %v193 = vld [vmem:[%s192] ss:$8 sm:$0x7]
    %v194 = vadd.f32 %v183, %v193
    %s195 = sld [smem:[#allocation3 + $0x182]]
    %s196 = sshra.s32 %s195, 3
    %s197 = sand.u32 %s195, 7
    %s198 = sshra.s32 %s195, 3
    %s199 = sand.u32 %s195, 7
    %s200 = smul.u32 %s196, 3
    %s201 = smul.u32 %s200, 8
    %s202 = sadd.s32 %s201, %s199
    %s203 = scalar_lea.vmem [#allocation4], %s202
    %v204 = vld [vmem:[%s203] ss:$8 sm:$0x7]
    %v205 = vadd.f32 %v194, %v204
    %s206 = sld [smem:[#allocation3 + $0x183]]
    %s207 = sshra.s32 %s206, 3
    %s208 = sand.u32 %s206, 7
    %s209 = sshra.s32 %s206, 3
    %s210 = sand.u32 %s206, 7
    %s211 = smul.u32 %s207, 3
    %s212 = smul.u32 %s211, 8
    %s213 = sadd.s32 %s212, %s210
    %s214 = scalar_lea.vmem [#allocation4], %s213
    %v215 = vld [vmem:[%s214] ss:$8 sm:$0x7]
    %v216 = vadd.f32 %v205, %v215
    %v217 = vmul.f32 %v216, 0.25
    %s218 = scalar_lea.vmem [#allocation7], 3
    %219 = vst.msk [vmem:[%s218] ss:$8 sm:$0x7] %vm77, %v217
    %220 = vst.msk [vmem:[%s218] ss:$8 sm:$0x0] %vm77, %v217
    %s221 = sld [smem:[#allocation3 + $0x200]]
    %s222 = sshra.s32 %s221, 3
    %s223 = sand.u32 %s221, 7
    %s224 = sshra.s32 %s221, 3
    %s225 = sand.u32 %s221, 7
    %s226 = smul.u32 %s222, 3
    %s227 = smul.u32 %s226, 8
    %s228 = sadd.s32 %s227, %s225
    %s229 = scalar_lea.vmem [#allocation4], %s228
    %v230 = vld [vmem:[%s229] ss:$8 sm:$0x7]
    %s231 = sld [smem:[#allocation3 + $0x201]]
    %s232 = sshra.s32 %s231, 3
    %s233 = sand.u32 %s231, 7
    %s234 = sshra.s32 %s231, 3
    %s235 = sand.u32 %s231, 7
    %s236 = smul.u32 %s232, 3
    %s237 = smul.u32 %s236, 8
    %s238 = sadd.s32 %s237, %s235
    %s239 = scalar_lea.vmem [#allocation4], %s238
    %v240 = vld [vmem:[%s239] ss:$8 sm:$0x7]
    %v241 = vadd.f32 %v230, %v240
    %s242 = sld [smem:[#allocation3 + $0x202]]
    %s243 = sshra.s32 %s242, 3
    %s244 = sand.u32 %s242, 7
    %s245 = sshra.s32 %s242, 3
    %s246 = sand.u32 %s242, 7
    %s247 = smul.u32 %s243, 3
    %s248 = smul.u32 %s247, 8
    %s249 = sadd.s32 %s248, %s246
    %s250 = scalar_lea.vmem [#allocation4], %s249
    %v251 = vld [vmem:[%s250] ss:$8 sm:$0x7]
    %v252 = vadd.f32 %v241, %v251
    %s253 = sld [smem:[#allocation3 + $0x203]]
    %s254 = sshra.s32 %s253, 3
    %s255 = sand.u32 %s253, 7
    %s256 = sshra.s32 %s253, 3
    %s257 = sand.u32 %s253, 7
    %s258 = smul.u32 %s254, 3
    %s259 = smul.u32 %s258, 8
    %s260 = sadd.s32 %s259, %s257
    %s261 = scalar_lea.vmem [#allocation4], %s260
    %v262 = vld [vmem:[%s261] ss:$8 sm:$0x7]
    %v263 = vadd.f32 %v252, %v262
    %v264 = vmul.f32 %v263, 0.25
    %s265 = scalar_lea.vmem [#allocation7], 4
    %266 = vst.msk [vmem:[%s265] ss:$8 sm:$0x7] %vm77, %v264
    %267 = vst.msk [vmem:[%s265] ss:$8 sm:$0x0] %vm77, %v264
    %s268 = sld [smem:[#allocation3 + $0x280]]
    %s269 = sshra.s32 %s268, 3
    %s270 = sand.u32 %s268, 7
    %s271 = sshra.s32 %s268, 3
    %s272 = sand.u32 %s268, 7
    %s273 = smul.u32 %s269, 3
    %s274 = smul.u32 %s273, 8
    %s275 = sadd.s32 %s274, %s272
    %s276 = scalar_lea.vmem [#allocation4], %s275
    %v277 = vld [vmem:[%s276] ss:$8 sm:$0x7]
    %s278 = sld [smem:[#allocation3 + $0x281]]
    %s279 = sshra.s32 %s278, 3
    %s280 = sand.u32 %s278, 7
    %s281 = sshra.s32 %s278, 3
    %s282 = sand.u32 %s278, 7
    %s283 = smul.u32 %s279, 3
    %s284 = smul.u32 %s283, 8
    %s285 = sadd.s32 %s284, %s282
    %s286 = scalar_lea.vmem [#allocation4], %s285
    %v287 = vld [vmem:[%s286] ss:$8 sm:$0x7]
    %v288 = vadd.f32 %v277, %v287
    %s289 = sld [smem:[#allocation3 + $0x282]]
    %s290 = sshra.s32 %s289, 3
    %s291 = sand.u32 %s289, 7
    %s292 = sshra.s32 %s289, 3
    %s293 = sand.u32 %s289, 7
    %s294 = smul.u32 %s290, 3
    %s295 = smul.u32 %s294, 8
    %s296 = sadd.s32 %s295, %s293
    %s297 = scalar_lea.vmem [#allocation4], %s296
    %v298 = vld [vmem:[%s297] ss:$8 sm:$0x7]
    %v299 = vadd.f32 %v288, %v298
    %s300 = sld [smem:[#allocation3 + $0x283]]
    %s301 = sshra.s32 %s300, 3
    %s302 = sand.u32 %s300, 7
    %s303 = sshra.s32 %s300, 3
    %s304 = sand.u32 %s300, 7
    %s305 = smul.u32 %s301, 3
    %s306 = smul.u32 %s305, 8
    %s307 = sadd.s32 %s306, %s304
    %s308 = scalar_lea.vmem [#allocation4], %s307
    %v309 = vld [vmem:[%s308] ss:$8 sm:$0x7]
    %v310 = vadd.f32 %v299, %v309
    %v311 = vmul.f32 %v310, 0.25
    %s312 = scalar_lea.vmem [#allocation7], 5
    %313 = vst.msk [vmem:[%s312] ss:$8 sm:$0x7] %vm77, %v311
    %314 = vst.msk [vmem:[%s312] ss:$8 sm:$0x0] %vm77, %v311
    %s315 = sld [smem:[#allocation3 + $0x300]]
    %s316 = sshra.s32 %s315, 3
    %s317 = sand.u32 %s315, 7
    %s318 = sshra.s32 %s315, 3
    %s319 = sand.u32 %s315, 7
    %s320 = smul.u32 %s316, 3
    %s321 = smul.u32 %s320, 8
    %s322 = sadd.s32 %s321, %s319
    %s323 = scalar_lea.vmem [#allocation4], %s322
    %v324 = vld [vmem:[%s323] ss:$8 sm:$0x7]
    %s325 = sld [smem:[#allocation3 + $0x301]]
    %s326 = sshra.s32 %s325, 3
    %s327 = sand.u32 %s325, 7
    %s328 = sshra.s32 %s325, 3
    %s329 = sand.u32 %s325, 7
    %s330 = smul.u32 %s326, 3
    %s331 = smul.u32 %s330, 8
    %s332 = sadd.s32 %s331, %s329
    %s333 = scalar_lea.vmem [#allocation4], %s332
    %v334 = vld [vmem:[%s333] ss:$8 sm:$0x7]
    %v335 = vadd.f32 %v324, %v334
    %s336 = sld [smem:[#allocation3 + $0x302]]
    %s337 = sshra.s32 %s336, 3
    %s338 = sand.u32 %s336, 7
    %s339 = sshra.s32 %s336, 3
    %s340 = sand.u32 %s336, 7
    %s341 = smul.u32 %s337, 3
    %s342 = smul.u32 %s341, 8
    %s343 = sadd.s32 %s342, %s340
    %s344 = scalar_lea.vmem [#allocation4], %s343
    %v345 = vld [vmem:[%s344] ss:$8 sm:$0x7]
    %v346 = vadd.f32 %v335, %v345
    %s347 = sld [smem:[#allocation3 + $0x303]]
    %s348 = sshra.s32 %s347, 3
    %s349 = sand.u32 %s347, 7
    %s350 = sshra.s32 %s347, 3
    %s351 = sand.u32 %s347, 7
    %s352 = smul.u32 %s348, 3
    %s353 = smul.u32 %s352, 8
    %s354 = sadd.s32 %s353, %s351
    %s355 = scalar_lea.vmem [#allocation4], %s354
    %v356 = vld [vmem:[%s355] ss:$8 sm:$0x7]
    %v357 = vadd.f32 %v346, %v356
    %v358 = vmul.f32 %v357, 0.25
    %s359 = scalar_lea.vmem [#allocation7], 6
    %360 = vst.msk [vmem:[%s359] ss:$8 sm:$0x7] %vm77, %v358
    %361 = vst.msk [vmem:[%s359] ss:$8 sm:$0x0] %vm77, %v358
    %s362 = sld [smem:[#allocation3 + $0x380]]
    %s363 = sshra.s32 %s362, 3
    %s364 = sand.u32 %s362, 7
    %s365 = sshra.s32 %s362, 3
    %s366 = sand.u32 %s362, 7
    %s367 = smul.u32 %s363, 3
    %s368 = smul.u32 %s367, 8
    %s369 = sadd.s32 %s368, %s366
    %s370 = scalar_lea.vmem [#allocation4], %s369
    %v371 = vld [vmem:[%s370] ss:$8 sm:$0x7]
    %s372 = sld [smem:[#allocation3 + $0x381]]
    %s373 = sshra.s32 %s372, 3
    %s374 = sand.u32 %s372, 7
    %s375 = sshra.s32 %s372, 3
    %s376 = sand.u32 %s372, 7
    %s377 = smul.u32 %s373, 3
    %s378 = smul.u32 %s377, 8
    %s379 = sadd.s32 %s378, %s376
    %s380 = scalar_lea.vmem [#allocation4], %s379
    %v381 = vld [vmem:[%s380] ss:$8 sm:$0x7]
    %v382 = vadd.f32 %v371, %v381
    %s383 = sld [smem:[#allocation3 + $0x382]]
    %s384 = sshra.s32 %s383, 3
    %s385 = sand.u32 %s383, 7
    %s386 = sshra.s32 %s383, 3
    %s387 = sand.u32 %s383, 7
    %s388 = smul.u32 %s384, 3
    %s389 = smul.u32 %s388, 8
    %s390 = sadd.s32 %s389, %s387
    %s391 = scalar_lea.vmem [#allocation4], %s390
    %v392 = vld [vmem:[%s391] ss:$8 sm:$0x7]
    %v393 = vadd.f32 %v382, %v392
    %s394 = sld [smem:[#allocation3 + $0x383]]
    %s395 = sshra.s32 %s394, 3
    %s396 = sand.u32 %s394, 7
    %s397 = sshra.s32 %s394, 3
    %s398 = sand.u32 %s394, 7
    %s399 = smul.u32 %s395, 3
    %s400 = smul.u32 %s399, 8
    %s401 = sadd.s32 %s400, %s398
    %s402 = scalar_lea.vmem [#allocation4], %s401
    %v403 = vld [vmem:[%s402] ss:$8 sm:$0x7]
    %v404 = vadd.f32 %v393, %v403
    %v405 = vmul.f32 %v404, 0.25
    %s406 = scalar_lea.vmem [#allocation7], 7
    %407 = vst.msk [vmem:[%s406] ss:$8 sm:$0x7] %vm77, %v405
    %408 = vst.msk [vmem:[%s406] ss:$8 sm:$0x0] %vm77, %v405
    // Predicated region
    $region10: #{tpu_custom_call.1} parent=1 // pred_check
      _
    $region11: #{tpu_custom_call.1} parent=1 // pred_check_branch
      %410 = sbr.rel (0) target = $region13
    $region12: #{tpu_custom_call.1} parent=1 // pred_region
      %s412 = ssub.s32 384, 384
      %413 = vsyncadd [#allocation6], %s412
      %s415 = sshll.u32 [#allocation7], 4
      %s416 = int_to_ptr.vmem [resolvable:$true] %s415
      %418 = dma.vmem_to_hbm [thread:$0]  %s416, 384, %s2, [#allocation6]
    $region13: #{tpu_custom_call.1} parent=1 // pred_fallthru
      _
    // Predicated region
    $region14: #{tpu_custom_call.1} parent=1 // pred_check
      _
    $region15: #{tpu_custom_call.1} parent=1 // pred_check_branch
      %420 = sbr.rel (0) target = $region17
    $region16: #{tpu_custom_call.1} parent=1 // pred_region
      %421 = dma.done [#allocation6], 384
    $region17: #{tpu_custom_call.1} parent=1 // pred_fallthru
      _
    %422 = vsyncpa [#allocation5], 1
    %423 = vsyncpa [#allocation6], 1

</llo_original>
